<compile_context>
chip_gen: v5e
topology: v5e:2x2
jax: 0.10.0
libtpu: 0.0.40
codegen_flags: <defaults>
</compile_context>

<pallas_src>
import functools

import jax
import jax.numpy as jnp
from jax.experimental import pallas as pl
from jax.experimental.pallas import tpu as pltpu


def _round_up(n, m):
    return (n + m - 1) // m * m


def ctrnn_kernel(x_ref, h_ref, w_in_ref, w_hh_ref, b_ref, out_ref, *, alpha, tn):
    # Two MXU pushes into one f32 accumulator, then the f32 epilogue.
    pre = jnp.dot(x_ref[...], w_in_ref[...], preferred_element_type=jnp.float32)
    pre = pre + jnp.dot(h_ref[...], w_hh_ref[...],
                        preferred_element_type=jnp.float32)
    pre = pre + b_ref[...]                       # (1, tn) broadcast over sublanes
    act = jnp.tanh(pre)
    if alpha == 1.0:
        # tau == 1: h_new = tanh(pre); the residual term vanishes.
        out_ref[...] = act.astype(out_ref.dtype)
    else:
        # Residual term: lane-aligned slice of the already-resident h block.
        off = pl.multiple_of(pl.program_id(0) * tn, 128)
        h_tile = h_ref[:, pl.ds(off, tn)].astype(jnp.float32)
        out_ref[...] = ((1.0 - alpha) * h_tile + alpha * act).astype(out_ref.dtype)


def ctrnn_cell(x, h, w_in_t, b_in, w_hh_t, b_hh, tau, *,
               tm=256, tn=512, compute_dtype=None):
    """Single CTRNN step.

    x: (B, I), h: (B, H), w_in_t: (I, H), w_hh_t: (H, H), biases: (H,).
    Weights are the transposed PyTorch Linear weights (feature-last layout).
    tau is a static Python number (folded at trace time; a traced tau would
    require a scalar operand instead).
    """
    B, I = x.shape
    H = h.shape[1]
    alpha = 1.0 / float(tau)
    out_dtype = x.dtype
    cd = jnp.dtype(compute_dtype) if compute_dtype is not None else jnp.dtype(x.dtype)

    # Tile sizes: sublane/lane aligned, clamped to the padded problem size.
    tm = max(8, _round_up(min(tm, _round_up(B, 8)), 8))
    tn = max(128, _round_up(min(tn, _round_up(H, 128)), 128))
    B_pad = _round_up(B, tm)
    H_pad = _round_up(H, tn)
    I_pad = _round_up(I, 128)

    def pad2(a, rows, cols, dtype):
        a = a.astype(dtype)
        if a.shape == (rows, cols):
            return a
        return jnp.pad(a, ((0, rows - a.shape[0]), (0, cols - a.shape[1])))

    xp = pad2(x, B_pad, I_pad, cd)
    hp = pad2(h, B_pad, H_pad, cd)
    wi = pad2(w_in_t, I_pad, H_pad, cd)
    wh = pad2(w_hh_t, H_pad, H_pad, cd)
    bias = pad2((b_in + b_hh).reshape(1, H), 1, H_pad, jnp.float32)

    # Grid: (H-tiles, B-tiles); last axis iterates fastest -> batch innermost,
    # so weight blocks (indexed by j only) are reused across batch tiles.
    grid = (H_pad // tn, B_pad // tm)

    in_specs = [
        pl.BlockSpec((tm, I_pad), lambda j, i: (i, 0)),    # x
        pl.BlockSpec((tm, H_pad), lambda j, i: (i, 0)),    # h (full contraction width)
        pl.BlockSpec((I_pad, tn), lambda j, i: (0, j)),    # W_in^T column tile
        pl.BlockSpec((H_pad, tn), lambda j, i: (0, j)),    # W_hh^T column tile
        pl.BlockSpec((1, tn),     lambda j, i: (0, j)),    # b_in + b_hh
    ]
    out_specs = pl.BlockSpec((tm, tn), lambda j, i: (i, j))

    # VMEM budget: double-buffered blocks + headroom, capped under v7x's 64 MiB.
    isz = cd.itemsize
    osz = jnp.dtype(out_dtype).itemsize
    block_bytes = (tm * I_pad * isz + tm * H_pad * isz
                   + I_pad * tn * isz + H_pad * tn * isz
                   + tn * 4 + tm * tn * osz)
    vmem_limit = int(min(max(2 * block_bytes + (4 << 20), 16 << 20), 48 << 20))

    cost = pl.CostEstimate(
        flops=2 * B_pad * (I_pad + H_pad) * H_pad,
        transcendentals=B_pad * H_pad,
        bytes_accessed=(isz * (B_pad * I_pad + B_pad * H_pad
                               + I_pad * H_pad + H_pad * H_pad)
                        + 4 * H_pad + osz * B_pad * H_pad),
    )

    out = pl.pallas_call(
        functools.partial(ctrnn_kernel, alpha=alpha, tn=tn),
        out_shape=jax.ShapeDtypeStruct((B_pad, H_pad), out_dtype),
        grid_spec=pltpu.PrefetchScalarGridSpec(
            num_scalar_prefetch=0,
            grid=grid,
            in_specs=in_specs,
            out_specs=out_specs,
        ),
        compiler_params=pltpu.CompilerParams(
            dimension_semantics=("parallel", "parallel"),
            vmem_limit_bytes=vmem_limit,
        ),
        cost_estimate=cost,
    )(xp, hp, wi, wh, bias)

    return out[:B, :H]


def reference(x, h, w_in_t, b_in, w_hh_t, b_hh, tau):
    pre = x @ w_in_t + b_in + h @ w_hh_t + b_hh
    return h + (-h + jnp.tanh(pre)) / tau


def _init_params(key, input_size, hidden_size):
    k_wi, k_bi, k_wh, k_bh = jax.random.split(key, 4)
    bi = 1.0 / jnp.sqrt(input_size)
    bh = 1.0 / jnp.sqrt(hidden_size)
    w_in_t = jax.random.uniform(k_wi, (input_size, hidden_size),
                                minval=-bi, maxval=bi, dtype=jnp.float32)
    b_in = jax.random.uniform(k_bi, (hidden_size,),
                              minval=-bi, maxval=bi, dtype=jnp.float32)
    w_hh_t = jax.random.uniform(k_wh, (hidden_size, hidden_size),
                                minval=-bh, maxval=bh, dtype=jnp.float32)
    b_hh = jax.random.uniform(k_bh, (hidden_size,),
                              minval=-bh, maxval=bh, dtype=jnp.float32)
    return w_in_t, b_in, w_hh_t, b_hh


if __name__ == "__main__":
    key = jax.random.PRNGKey(0)
    ok = True

    # Case 1: spec-sized single step (B=8, I=16, H=32), both tau regimes, f32.
    k_p, k_x, k_h, key = jax.random.split(key, 4)
    B, I, H = 8, 16, 32
    w_in_t, b_in, w_hh_t, b_hh = _init_params(k_p, I, H)
    x = jax.random.normal(k_x, (B, I), dtype=jnp.float32)
    h = jax.random.normal(k_h, (B, H), dtype=jnp.float32)
    for tau in (1.0, 1.5):
        out = jax.block_until_ready(
            ctrnn_cell(x, h, w_in_t, b_in, w_hh_t, b_hh, tau))
        ref = reference(x, h, w_in_t, b_in, w_hh_t, b_hh, tau)
        ok = ok and out.shape == (B, H)
        ok = ok and bool(jnp.allclose(out, ref, atol=1e-4, rtol=1e-4))

    # Case 2: multi-tile grid (2 H-tiles x 2 B-tiles) to exercise tiling and
    # weight-block reuse across the inner batch axis.
    k_p2, k_x2, k_h2, key = jax.random.split(key, 4)
    B2, I2, H2 = 16, 16, 256
    params2 = _init_params(k_p2, I2, H2)
    x2 = jax.random.normal(k_x2, (B2, I2), dtype=jnp.float32)
    h2 = jax.random.normal(k_h2, (B2, H2), dtype=jnp.float32)
    out2 = jax.block_until_ready(ctrnn_cell(x2, h2, *params2, 2.0, tm=8, tn=128))
    ref2 = reference(x2, h2, *params2, 2.0)
    ok = ok and out2.shape == (B2, H2)
    ok = ok and bool(jnp.allclose(out2, ref2, atol=1e-4, rtol=1e-4))

    # Case 3: bf16 matmul operands (f32 accumulate + f32 epilogue), loose tol.
    out3 = jax.block_until_ready(
        ctrnn_cell(x, h, w_in_t, b_in, w_hh_t, b_hh, 1.5,
                   compute_dtype=jnp.bfloat16))
    ref3 = reference(x, h, w_in_t, b_in, w_hh_t, b_hh, 1.5)
    ok = ok and out3.shape == (B, H)
    ok = ok and bool(jnp.allclose(out3, ref3, atol=5e-2, rtol=5e-2))

    assert ok
    print("KERNEL_OK")
</pallas_src>

<mosaic_0001>
module attributes {stable_mosaic.version = 11 : i64} {
  func.func @ctrnn_kernel(%arg0: i32, %arg1: i32, %arg2: memref<8x128xf32, #tpu.memory_space<vmem>>, %arg3: memref<8x128xf32, #tpu.memory_space<vmem>>, %arg4: memref<128x128xf32, #tpu.memory_space<vmem>>, %arg5: memref<128x128xf32, #tpu.memory_space<vmem>>, %arg6: memref<1x128xf32, #tpu.memory_space<vmem>>, %arg7: memref<8x128xf32, #tpu.memory_space<vmem>>) attributes {dimension_semantics = [#tpu.dimension_semantics<parallel>, #tpu.dimension_semantics<parallel>], iteration_bounds = array<i64: 1, 1>, scalar_prefetch = 0 : i64, scratch_operands = 0 : i64, tpu.core_type = #tpu.core_type<tc>, window_params = [{transform_indices = @transform_0, window_bounds = array<i64: 8, 128>}, {transform_indices = @transform_1, window_bounds = array<i64: 8, 128>}, {transform_indices = @transform_2, window_bounds = array<i64: 128, 128>}, {transform_indices = @transform_3, window_bounds = array<i64: 128, 128>}, {transform_indices = @transform_4, window_bounds = array<i64: 1, 128>}, {transform_indices = @transform_5, window_bounds = array<i64: 8, 128>}]} {
    %c0 = arith.constant 0 : index
    %c0_0 = arith.constant 0 : index
    %0 = vector.load %arg2[%c0, %c0_0] : memref<8x128xf32, #tpu.memory_space<vmem>>, vector<8x128xf32>
    %c0_1 = arith.constant 0 : index
    %c0_2 = arith.constant 0 : index
    %1 = vector.load %arg4[%c0_1, %c0_2] : memref<128x128xf32, #tpu.memory_space<vmem>>, vector<128x128xf32>
    %cst = arith.constant dense<0.000000e+00> : vector<8x128xf32>
    %2 = tpu.matmul %0, %1, %cst {dimension_numbers = #tpu.dot_dimension_numbers<[1], [0], [0], [1], [0, 0, 1, 1], [], []>} : vector<8x128xf32>, vector<128x128xf32>, vector<8x128xf32> -> vector<8x128xf32>
    %c0_3 = arith.constant 0 : index
    %c0_4 = arith.constant 0 : index
    %3 = vector.load %arg3[%c0_3, %c0_4] : memref<8x128xf32, #tpu.memory_space<vmem>>, vector<8x128xf32>
    %c0_5 = arith.constant 0 : index
    %c0_6 = arith.constant 0 : index
    %4 = vector.load %arg5[%c0_5, %c0_6] : memref<128x128xf32, #tpu.memory_space<vmem>>, vector<128x128xf32>
    %cst_7 = arith.constant dense<0.000000e+00> : vector<8x128xf32>
    %5 = tpu.matmul %3, %4, %cst_7 {dimension_numbers = #tpu.dot_dimension_numbers<[1], [0], [0], [1], [0, 0, 1, 1], [], []>} : vector<8x128xf32>, vector<128x128xf32>, vector<8x128xf32> -> vector<8x128xf32>
    %6 = arith.addf %2, %5 : vector<8x128xf32>
    %c0_8 = arith.constant 0 : index
    %c0_9 = arith.constant 0 : index
    %7 = vector.load %arg6[%c0_8, %c0_9] : memref<1x128xf32, #tpu.memory_space<vmem>>, vector<1x128xf32>
    %8 = vector.broadcast %7 : vector<1x128xf32> to vector<8x128xf32>
    %9 = arith.addf %6, %8 : vector<8x128xf32>
    %10 = math.tanh %9 : vector<8x128xf32>
    %c0_10 = arith.constant 0 : index
    %c0_11 = arith.constant 0 : index
    %11 = vector.load %arg7[%c0_10, %c0_11] : memref<8x128xf32, #tpu.memory_space<vmem>>, vector<8x128xf32>
    tpu.vector_store %arg7[%c0_10, %c0_11], %10 {strides = array<i32>} : memref<8x128xf32, #tpu.memory_space<vmem>>, vector<8x128xf32>,
    return
  }
  func.func @transform_0(%arg0: i32, %arg1: i32) -> (i32, i32) {
    %c0_i32 = arith.constant 0 : i32
    %c0_i32_0 = arith.constant 0 : i32
    return %arg1, %c0_i32 : i32, i32
  }
  func.func @transform_1(%arg0: i32, %arg1: i32) -> (i32, i32) {
    %c0_i32 = arith.constant 0 : i32
    %c0_i32_0 = arith.constant 0 : i32
    return %arg1, %c0_i32 : i32, i32
  }
  func.func @transform_2(%arg0: i32, %arg1: i32) -> (i32, i32) {
    %c0_i32 = arith.constant 0 : i32
    %c0_i32_0 = arith.constant 0 : i32
    return %c0_i32, %arg0 : i32, i32
  }
  func.func @transform_3(%arg0: i32, %arg1: i32) -> (i32, i32) {
    %c0_i32 = arith.constant 0 : i32
    %c0_i32_0 = arith.constant 0 : i32
    return %c0_i32, %arg0 : i32, i32
  }
  func.func @transform_4(%arg0: i32, %arg1: i32) -> (i32, i32) {
    %c0_i32 = arith.constant 0 : i32
    %c0_i32_0 = arith.constant 0 : i32
    return %c0_i32, %arg0 : i32, i32
  }
  func.func @transform_5(%arg0: i32, %arg1: i32) -> (i32, i32) {
    %c0_i32 = arith.constant 0 : i32
    return %arg1, %arg0 : i32, i32
  }
}

</mosaic_0001>

<llo_original>
// kernel: tpu_custom_call.1
$region0: #{tpu_custom_call.1}
  #allocation0 [shape = 'u32[]', space=smem, size = 0x4, offset = 0x4, fixed_abs, tag = 'smem constant byte address 0x4 - core index']
  #allocation1 [shape = 'u32[72,128]{1,0:T(1,128)}', space=vmem, size = 0x9000, scoped, tag = 'internal scratch']
  %s0 = inlined_call_operand.hbm [shape: f32[8,128], index: 0, kind: input, shape index: {}]
  %s1 = inlined_call_operand.hbm [shape: f32[8,128], index: 1, kind: input, shape index: {}]
  %s2 = inlined_call_operand.hbm [shape: f32[128,128], index: 2, kind: input, shape index: {}]
  %s3 = inlined_call_operand.hbm [shape: f32[128,128], index: 3, kind: input, shape index: {}]
  %s4 = inlined_call_operand.vmem [shape: f32[1,128], index: 4, kind: input, shape index: {}]
  %s5 = inlined_call_operand.hbm [shape: f32[8,128], index: 5, kind: output, shape index: {}]
  %s6 = sld [smem:[#allocation0]]
  $region46: #{tpu_custom_call.1} parent=0
    _
  %s8 = ssub.s32 1, %s6
  %s9 = scalar_select 0, %s8, %s6
  $region1: #{tpu_custom_call.1} parent=0
    #allocation2 [shape = 'u8[4096]{0}', space=vmem, size = 0x1000, scoped, tag = 'input window, operand 0, single buffered']
    #allocation3 [shape = 's32[1]{0}', space=sflag, size = 0x4, scoped, tag = 'scoped memory for tpu_custom_call.1']
    #allocation4 [shape = 's32[1]{0}', space=sflag, size = 0x4, scoped, tag = 'scoped memory for tpu_custom_call.1']
    #allocation5 [shape = 'u8[4096]{0}', space=vmem, size = 0x1000, scoped, tag = 'input window, operand 1, single buffered']
    #allocation6 [shape = 's32[1]{0}', space=sflag, size = 0x4, scoped, tag = 'scoped memory for tpu_custom_call.1']
    #allocation7 [shape = 'u8[65536]{0}', space=vmem, size = 0x10000, scoped, tag = 'input window, operand 2, single buffered']
    #allocation8 [shape = 'u8[65536]{0}', space=vmem, size = 0x10000, scoped, tag = 'input window, operand 3, single buffered']
    #allocation9 [shape = 's32[1]{0}', space=sflag, size = 0x4, scoped, tag = 'scoped memory for tpu_custom_call.1']
    #allocation10 [shape = 'u8[4096]{0}', space=vmem, size = 0x1000, scoped, tag = 'output window, operand 0, single buffered']
    %10 = vsyncpa [#allocation3], 0
    %11 = vsyncpa [#allocation6], 0
    %12 = vsyncpa [#allocation9], 0
    %13 = vsyncpa [#allocation4], 0
    // Predicated region
    $region2: #{tpu_custom_call.1} parent=1 // pred_check
      _
    $region3: #{tpu_custom_call.1} parent=1 // pred_check_branch
      %15 = sbr.rel (0) target = $region5
    $region4: #{tpu_custom_call.1} parent=1 // pred_region
      %17 = vsyncadd [#allocation3], 0
      %s19 = sshll.u32 %s0, 4
      %s20 = int_to_ptr.hbm [resolvable:$true] %s19
      %s21 = sshll.u32 [#allocation2], 4
      %s22 = int_to_ptr.vmem [resolvable:$true] %s21
      %24 = dma.hbm_to_vmem [thread:$0]  %s20, 128, %s22, [#allocation3]
    $region5: #{tpu_custom_call.1} parent=1 // pred_fallthru
      _
    // Predicated region
    $region6: #{tpu_custom_call.1} parent=1 // pred_check
      _
    $region7: #{tpu_custom_call.1} parent=1 // pred_check_branch
      %26 = sbr.rel (0) target = $region9
    $region8: #{tpu_custom_call.1} parent=1 // pred_region
      %28 = vsyncadd [#allocation6], 0
      %s30 = sshll.u32 %s1, 4
      %s31 = int_to_ptr.hbm [resolvable:$true] %s30
      %s32 = sshll.u32 [#allocation5], 4
      %s33 = int_to_ptr.vmem [resolvable:$true] %s32
      %35 = dma.hbm_to_vmem [thread:$0]  %s31, 128, %s33, [#allocation6]
    $region9: #{tpu_custom_call.1} parent=1 // pred_fallthru
      _
    // Predicated region
    $region10: #{tpu_custom_call.1} parent=1 // pred_check
      _
    $region11: #{tpu_custom_call.1} parent=1 // pred_check_branch
      %37 = sbr.rel (0) target = $region13
    $region12: #{tpu_custom_call.1} parent=1 // pred_region
      %39 = vsyncadd [#allocation6], 0
      %s40 = sshll.u32 %s2, 4
      %s41 = int_to_ptr.hbm [resolvable:$true] %s40
      %s42 = sshll.u32 [#allocation7], 4
      %s43 = int_to_ptr.vmem [resolvable:$true] %s42
      %48 = dma.hbm_to_vmem [thread:$0]  %s41, 2048, %s43, [#allocation6], 128, 128, 8
    $region13: #{tpu_custom_call.1} parent=1 // pred_fallthru
      _
    // Predicated region
    $region14: #{tpu_custom_call.1} parent=1 // pred_check
      _
    $region15: #{tpu_custom_call.1} parent=1 // pred_check_branch
      %50 = sbr.rel (0) target = $region17
    $region16: #{tpu_custom_call.1} parent=1 // pred_region
      %52 = vsyncadd [#allocation9], 0
      %s53 = sshll.u32 %s3, 4
      %s54 = int_to_ptr.hbm [resolvable:$true] %s53
      %s55 = sshll.u32 [#allocation8], 4
      %s56 = int_to_ptr.vmem [resolvable:$true] %s55
      %61 = dma.hbm_to_vmem [thread:$0]  %s54, 2048, %s56, [#allocation9], 128, 128, 8
    $region17: #{tpu_custom_call.1} parent=1 // pred_fallthru
      _
    // Predicated region
    $region18: #{tpu_custom_call.1} parent=1 // pred_check
      _
    $region19: #{tpu_custom_call.1} parent=1 // pred_check_branch
      %63 = sbr.rel (0) target = $region21
    $region20: #{tpu_custom_call.1} parent=1 // pred_region
      _
    $region21: #{tpu_custom_call.1} parent=1 // pred_fallthru
      _
    // Predicated region
    $region22: #{tpu_custom_call.1} parent=1 // pred_check
      _
    $region23: #{tpu_custom_call.1} parent=1 // pred_check_branch
      %65 = sbr.rel (0) target = $region25
    $region24: #{tpu_custom_call.1} parent=1 // pred_region
      %67 = dma.done [#allocation3], 128
    $region25: #{tpu_custom_call.1} parent=1 // pred_fallthru
      _
    // Predicated region
    $region26: #{tpu_custom_call.1} parent=1 // pred_check
      _
    $region27: #{tpu_custom_call.1} parent=1 // pred_check_branch
      %69 = sbr.rel (0) target = $region29
    $region28: #{tpu_custom_call.1} parent=1 // pred_region
      %71 = dma.done [#allocation6], 128
    $region29: #{tpu_custom_call.1} parent=1 // pred_fallthru
      _
    // Predicated region
    $region30: #{tpu_custom_call.1} parent=1 // pred_check
      _
    $region31: #{tpu_custom_call.1} parent=1 // pred_check_branch
      %73 = sbr.rel (0) target = $region33
    $region32: #{tpu_custom_call.1} parent=1 // pred_region
      %75 = dma.done [#allocation6], 2048
    $region33: #{tpu_custom_call.1} parent=1 // pred_fallthru
      _
    // Predicated region
    $region34: #{tpu_custom_call.1} parent=1 // pred_check
      _
    $region35: #{tpu_custom_call.1} parent=1 // pred_check_branch
      %77 = sbr.rel (0) target = $region37
    $region36: #{tpu_custom_call.1} parent=1 // pred_region
      %79 = dma.done [#allocation9], 2048
    $region37: #{tpu_custom_call.1} parent=1 // pred_fallthru
      _
    %v80 = vld [vmem:[#allocation2] sm:$0xff]
    %v81 = vld [vmem:[#allocation7] sm:$0xff]
    %v82 = vld [vmem:[#allocation7 + $0x8] sm:$0xff]
    %v83 = vld [vmem:[#allocation7 + $0x10] sm:$0xff]
    %v84 = vld [vmem:[#allocation7 + $0x18] sm:$0xff]
    %v85 = vld [vmem:[#allocation7 + $0x20] sm:$0xff]
    %v86 = vld [vmem:[#allocation7 + $0x28] sm:$0xff]
    %v87 = vld [vmem:[#allocation7 + $0x30] sm:$0xff]
    %v88 = vld [vmem:[#allocation7 + $0x38] sm:$0xff]
    %v89 = vld [vmem:[#allocation7 + $0x40] sm:$0xff]
    %v90 = vld [vmem:[#allocation7 + $0x48] sm:$0xff]
    %v91 = vld [vmem:[#allocation7 + $0x50] sm:$0xff]
    %v92 = vld [vmem:[#allocation7 + $0x58] sm:$0xff]
    %v93 = vld [vmem:[#allocation7 + $0x60] sm:$0xff]
    %v94 = vld [vmem:[#allocation7 + $0x68] sm:$0xff]
    %v95 = vld [vmem:[#allocation7 + $0x70] sm:$0xff]
    %v96 = vld [vmem:[#allocation7 + $0x78] sm:$0xff]
    %v97 = vld [vmem:[#allocation5] sm:$0xff]
    %v98 = vld [vmem:[#allocation8] sm:$0xff]
    %v99 = vld [vmem:[#allocation8 + $0x8] sm:$0xff]
    %v100 = vld [vmem:[#allocation8 + $0x10] sm:$0xff]
    %v101 = vld [vmem:[#allocation8 + $0x18] sm:$0xff]
    %v102 = vld [vmem:[#allocation8 + $0x20] sm:$0xff]
    %v103 = vld [vmem:[#allocation8 + $0x28] sm:$0xff]
    %v104 = vld [vmem:[#allocation8 + $0x30] sm:$0xff]
    %v105 = vld [vmem:[#allocation8 + $0x38] sm:$0xff]
    %v106 = vld [vmem:[#allocation8 + $0x40] sm:$0xff]
    %v107 = vld [vmem:[#allocation8 + $0x48] sm:$0xff]
    %v108 = vld [vmem:[#allocation8 + $0x50] sm:$0xff]
    %v109 = vld [vmem:[#allocation8 + $0x58] sm:$0xff]
    %v110 = vld [vmem:[#allocation8 + $0x60] sm:$0xff]
    %v111 = vld [vmem:[#allocation8 + $0x68] sm:$0xff]
    %v112 = vld [vmem:[#allocation8 + $0x70] sm:$0xff]
    %v113 = vld [vmem:[#allocation8 + $0x78] sm:$0xff]
    %114 = vmatpush.msra.mxu0 %v113
    %115 = vmatpush.msra.mxu0 %v112
    %116 = vmatpush.msra.mxu0 %v111
    %117 = vmatpush.msra.mxu0 %v110
    %118 = vmatpush.msra.mxu0 %v109
    %119 = vmatpush.msra.mxu0 %v108
    %120 = vmatpush.msra.mxu0 %v107
    %121 = vmatpush.msra.mxu0 %v106
    %122 = vmatpush.msra.mxu0 %v105
    %123 = vmatpush.msra.mxu0 %v104
    %124 = vmatpush.msra.mxu0 %v103
    %125 = vmatpush.msra.mxu0 %v102
    %126 = vmatpush.msra.mxu0 %v101
    %127 = vmatpush.msra.mxu0 %v100
    %128 = vmatpush.msra.mxu0 %v99
    %129 = vmatpush.msra.mxu0 %v98
    %130 = vmatmul.f32.gmra.mxu0 %v97
    %v131 = vpop.f32.mrf.mxu0
    %v132 = vadd.f32 0.0, %v131
    %133 = vdwg.mxu0
    %134 = vmatpush.msra.mxu0 %v96
    %135 = vmatpush.msra.mxu0 %v95
    %136 = vmatpush.msra.mxu0 %v94
    %137 = vmatpush.msra.mxu0 %v93
    %138 = vmatpush.msra.mxu0 %v92
    %139 = vmatpush.msra.mxu0 %v91
    %140 = vmatpush.msra.mxu0 %v90
    %141 = vmatpush.msra.mxu0 %v89
    %142 = vmatpush.msra.mxu0 %v88
    %143 = vmatpush.msra.mxu0 %v87
    %144 = vmatpush.msra.mxu0 %v86
    %145 = vmatpush.msra.mxu0 %v85
    %146 = vmatpush.msra.mxu0 %v84
    %147 = vmatpush.msra.mxu0 %v83
    %148 = vmatpush.msra.mxu0 %v82
    %149 = vmatpush.msra.mxu0 %v81
    %150 = vmatmul.f32.gmra.mxu0 %v80
    %v151 = vpop.f32.mrf.mxu0
    %v152 = vadd.f32 %v132, %v151
    %153 = vdwg.mxu0
    %v154 = vld [vmem:[%s4] sm:$0x1]
    %v156 = vperm.slane %v154, 0
    %v158 = vadd.f32 %v152, %v156
    %v159 = vtanh.pop %v158
    %160 = vst [vmem:[#allocation10] sm:$0xff] %v159
    // Predicated region
    $region38: #{tpu_custom_call.1} parent=1 // pred_check
      _
    $region39: #{tpu_custom_call.1} parent=1 // pred_check_branch
      %162 = sbr.rel (0) target = $region41
    $region40: #{tpu_custom_call.1} parent=1 // pred_region
      %164 = vsyncadd [#allocation4], 0
      %s166 = sshll.u32 [#allocation10], 4
      %s167 = int_to_ptr.vmem [resolvable:$true] %s166
      %s168 = sshll.u32 %s5, 4
      %s169 = int_to_ptr.hbm [resolvable:$true] %s168
      %171 = dma.vmem_to_hbm [thread:$0]  %s167, 128, %s169, [#allocation4]
    $region41: #{tpu_custom_call.1} parent=1 // pred_fallthru
      _
    // Predicated region
    $region42: #{tpu_custom_call.1} parent=1 // pred_check
      _
    $region43: #{tpu_custom_call.1} parent=1 // pred_check_branch
      %173 = sbr.rel (0) target = $region45
    $region44: #{tpu_custom_call.1} parent=1 // pred_region
      %175 = dma.done [#allocation4], 128
    $region45: #{tpu_custom_call.1} parent=1 // pred_fallthru
      _
    %176 = vsyncpa [#allocation3], 1
    %177 = vsyncpa [#allocation6], 1
    %178 = vsyncpa [#allocation9], 1
    %179 = vsyncpa [#allocation4], 1

</llo_original>
